<compile_context>
chip_gen: v5e
topology: v5e:2x2
jax: 0.10.0
libtpu: 0.0.40
codegen_flags: <defaults>
</compile_context>

<pallas_src>
import functools

import jax
import jax.numpy as jnp
from jax.experimental import pallas as pl
from jax.experimental.pallas import tpu as pltpu

_LANE = 128
_EPS = 1e-5  # torch.nn.LayerNorm default


def _round_up(x: int, m: int) -> int:
    return ((x + m - 1) // m) * m


def _cdiv(a: int, b: int) -> int:
    return -(-a // b)


def _pad2d(a, rows: int, cols: int):
    return jnp.pad(a, ((0, rows - a.shape[0]), (0, cols - a.shape[1])))


# --------------------------------------------------------------------------
# Kernel
# --------------------------------------------------------------------------
def _generator_kernel(x_ref,
                      w0_ref, g0_ref, b0_ref,
                      w1_ref, g1_ref, b1_ref,
                      w2_ref, g2_ref, b2_ref,
                      o_ref, xpad_ref,
                      *, d_hidden: int, d_out: int, eps: float):
    """Fused Linear -> LayerNorm -> Tanh (x3), residuals on blocks 0 and 1.

    Padding invariant (load-bearing): gamma/beta are ZERO-padded beyond the
    true feature count and every weight's padded columns/rows are zero, so
    padded lanes of every block output are exact zeros and the LayerNorm sums
    over the padded width (divided by the true count) are exact.
    """
    x = x_ref[...].astype(jnp.float32)              # [tile_b, d_in] true width
    d_in = x.shape[1]
    mm_dtype = w0_ref.dtype                          # weights pre-cast in HBM

    def ln_tanh(h, g_ref, b_ref, d_valid):
        inv_d = jnp.float32(1.0 / d_valid)
        mean = jnp.sum(h, axis=-1, keepdims=True) * inv_d
        mean_sq = jnp.sum(h * h, axis=-1, keepdims=True) * inv_d
        var = jnp.maximum(mean_sq - mean * mean, 0.0)   # guard 1-pass cancellation
        normed = (h - mean) * jax.lax.rsqrt(var + eps)
        # zero-padded gamma/beta -> padded lanes return to exactly 0 (tanh(0)=0)
        return jnp.tanh(normed * g_ref[...] + b_ref[...])

    # Zero-padded copy of x at hidden width d_pad for the block-0 residual.
    # Re-zeroed every step (cheap) so correctness never depends on which core
    # of a megacore split ran step 0.
    xpad_ref[...] = jnp.zeros_like(xpad_ref)
    xpad_ref[:, :d_in] = x
    x_pad = xpad_ref[...]                            # [tile_b, d_pad]

    # Block 0 (residual)
    h0 = jnp.dot(x.astype(mm_dtype), w0_ref[...],
                 preferred_element_type=jnp.float32)
    a = ln_tanh(h0, g0_ref, b0_ref, d_hidden) + x_pad

    # Block 1 (residual)
    h1 = jnp.dot(a.astype(mm_dtype), w1_ref[...],
                 preferred_element_type=jnp.float32)
    a = ln_tanh(h1, g1_ref, b1_ref, d_hidden) + a

    # Block 2 (no residual)
    h2 = jnp.dot(a.astype(mm_dtype), w2_ref[...],
                 preferred_element_type=jnp.float32)
    o_ref[...] = ln_tanh(h2, g2_ref, b2_ref, d_out).astype(o_ref.dtype)


# --------------------------------------------------------------------------
# One-time parameter preparation (off the per-call path)
# --------------------------------------------------------------------------
def prepare_params(params, *, latent_dim: int, output_dim: int,
                   matmul_dtype=jnp.bfloat16):
    """Pad + cast parameters ONCE.

    * Weights stored pre-cast to `matmul_dtype` (bf16 default: full-rate MXU
      on v5e/v6e/v7x) -> no per-grid-step casts, half the weight DMA bytes.
    * gamma/beta stay f32 (LayerNorm math runs on the f32 VPU/EUP path).
    * ZERO padding of gamma/beta and of all padded weight columns/rows is the
      invariant the kernel's residual chain relies on — do not change it.
    """
    d_pad = _round_up(latent_dim, _LANE)
    o_pad = _round_up(output_dim, _LANE)

    def w(name, rows, cols):
        a = jnp.asarray(params[name], jnp.float32)
        return _pad2d(a, rows, cols).astype(matmul_dtype)

    def v(name, cols):
        a = jnp.asarray(params[name], jnp.float32).reshape(1, -1)
        return _pad2d(a, 1, cols)

    return {
        "w0": w("w0", latent_dim, d_pad), "g0": v("g0", d_pad), "b0": v("b0", d_pad),
        "w1": w("w1", d_pad, d_pad),      "g1": v("g1", d_pad), "b1": v("b1", d_pad),
        "w2": w("w2", d_pad, o_pad),      "g2": v("g2", o_pad), "b2": v("b2", o_pad),
    }


# --------------------------------------------------------------------------
# Forward wrapper
# --------------------------------------------------------------------------
def _pick_tile_b(batch: int) -> int:
    """Whole batch when small; otherwise >= 2 grid steps (v7x's second
    TensorCore gets work) with tiles capped at 1024 rows (v5e/v6e: fewer
    ~0.35us grid-step overheads on an overhead-bound kernel)."""
    if batch <= 512:
        return _round_up(batch, 8)
    num_tiles = max(2, _cdiv(batch, 1024))
    return min(1024, _round_up(_cdiv(batch, num_tiles), 8))


def _vmem_limit_bytes(tile_b, d_in, d_pad, o_pad, w_itemsize, act_itemsize):
    """Only override the compiler's default scoped-VMEM limit when the
    resident footprint (big latent dims) would approach it."""
    weight_bytes = (d_in * d_pad + d_pad * d_pad + d_pad * o_pad) * w_itemsize
    vec_bytes = (4 * d_pad + 2 * o_pad) * 4
    est = (2 * tile_b * d_in * act_itemsize        # input, double-buffered
           + 2 * tile_b * o_pad * act_itemsize     # output, double-buffered
           + 2 * (weight_bytes + vec_bytes)        # params, double-buffered
           + tile_b * d_pad * 4                    # x_pad scratch
           + 8 * tile_b * max(d_pad, o_pad) * 4)   # live f32 intermediates
    if est <= 24 * 1024 * 1024:
        return None
    return min(int(est * 1.25), 48 * 1024 * 1024)  # safe on v7x (64 MiB) too


@functools.partial(jax.jit, static_argnames=("output_dim",))
def generator_forward(noise, prepped, *, output_dim: int):
    """noise: [B, latent_dim] -> [B, output_dim]."""
    B, d_in = noise.shape
    d_pad = prepped["w1"].shape[0]
    o_pad = prepped["w2"].shape[1]

    tile_b = _pick_tile_b(B)
    b_pad = _round_up(B, tile_b)
    num_tiles = b_pad // tile_b

    x = noise if b_pad == B else jnp.pad(noise, ((0, b_pad - B), (0, 0)))

    kernel = functools.partial(_generator_kernel, d_hidden=d_in,
                               d_out=output_dim, eps=_EPS)

    # Input at true width (block last dim == full array dim -> legal);
    # output at its own lane-dense pad width.
    act_in_spec = pl.BlockSpec((tile_b, d_in), lambda i: (i, 0))
    act_out_spec = pl.BlockSpec((tile_b, o_pad), lambda i: (i, 0))
    # Constant index_map -> params stay VMEM-resident across grid steps.
    # (For very large d_pad, pipeline_mode=pl.Buffered(1) on these specs would
    #  also drop their pointless double buffer.)
    w0_spec = pl.BlockSpec((d_in, d_pad), lambda i: (0, 0))
    w1_spec = pl.BlockSpec((d_pad, d_pad), lambda i: (0, 0))
    w2_spec = pl.BlockSpec((d_pad, o_pad), lambda i: (0, 0))
    vh_spec = pl.BlockSpec((1, d_pad), lambda i: (0, 0))
    vo_spec = pl.BlockSpec((1, o_pad), lambda i: (0, 0))

    cp_kwargs = dict(dimension_semantics=("parallel",))
    vlim = _vmem_limit_bytes(tile_b, d_in, d_pad, o_pad,
                             prepped["w1"].dtype.itemsize,
                             noise.dtype.itemsize)
    if vlim is not None:
        cp_kwargs["vmem_limit_bytes"] = vlim

    out = pl.pallas_call(
        kernel,
        out_shape=jax.ShapeDtypeStruct((b_pad, o_pad), noise.dtype),
        grid_spec=pltpu.PrefetchScalarGridSpec(
            num_scalar_prefetch=0,
            grid=(num_tiles,),
            in_specs=[act_in_spec,
                      w0_spec, vh_spec, vh_spec,
                      w1_spec, vh_spec, vh_spec,
                      w2_spec, vo_spec, vo_spec],
            out_specs=act_out_spec,
            scratch_shapes=[pltpu.VMEM((tile_b, d_pad), jnp.float32)]),
        compiler_params=pltpu.CompilerParams(**cp_kwargs),
    )(x,
      prepped["w0"], prepped["g0"], prepped["b0"],
      prepped["w1"], prepped["g1"], prepped["b1"],
      prepped["w2"], prepped["g2"], prepped["b2"])

    return out[:B, :output_dim]


# --------------------------------------------------------------------------
# Parameter init + pure-JAX reference (mirrors the PyTorch module)
# --------------------------------------------------------------------------
def init_generator_params(key, latent_dim: int, output_dim: int):
    """Deterministic synthetic parameters (shapes match the PyTorch module)."""
    k0, k1, k2 = jax.random.split(key, 3)

    def lin(k, d_in, d_out):
        # torch Linear weight is [out, in]; we store the transpose [in, out]
        bound = 1.0 / jnp.sqrt(jnp.float32(d_in))
        return jax.random.uniform(k, (d_in, d_out), jnp.float32, -bound, bound)

    return {
        "w0": lin(k0, latent_dim, latent_dim),
        "g0": jnp.ones((1, latent_dim), jnp.float32),
        "b0": jnp.zeros((1, latent_dim), jnp.float32),
        "w1": lin(k1, latent_dim, latent_dim),
        "g1": jnp.ones((1, latent_dim), jnp.float32),
        "b1": jnp.zeros((1, latent_dim), jnp.float32),
        "w2": lin(k2, latent_dim, output_dim),
        "g2": jnp.ones((1, output_dim), jnp.float32),
        "b2": jnp.zeros((1, output_dim), jnp.float32),
    }


def _reference_forward(noise, params, eps=_EPS):
    """Pure-JAX reference mirroring the PyTorch forward (binary=True)."""
    def block(x, w, g, b, residual):
        h = x @ w
        mean = h.mean(-1, keepdims=True)
        var = ((h - mean) ** 2).mean(-1, keepdims=True)
        y = jnp.tanh((h - mean) / jnp.sqrt(var + eps) * g + b)
        return y + x if residual else y

    x = block(noise, params["w0"], params["g0"], params["b0"], True)
    x = block(x, params["w1"], params["g1"], params["b1"], True)
    x = block(x, params["w2"], params["g2"], params["b2"], False)
    return x


# TODO(synk): the binary=False LeakyReLU(0.2) constructor variant is not
# implemented; this kernel covers the binary=True (Tanh) forward used above.

if __name__ == "__main__":
    key = jax.random.PRNGKey(0)
    k_param, k_noise, k_big = jax.random.split(key, 3)

    batch, latent_dim, output_dim = 8, 32, 16
    params = init_generator_params(k_param, latent_dim, output_dim)
    noise = jax.random.normal(k_noise, (batch, latent_dim), jnp.float32)
    ref = _reference_forward(noise, params)

    # f32 matmul operands: strict numerical check of the fused kernel.
    prepped_f32 = prepare_params(params, latent_dim=latent_dim,
                                 output_dim=output_dim,
                                 matmul_dtype=jnp.float32)
    out_f32 = jax.block_until_ready(
        generator_forward(noise, prepped_f32, output_dim=output_dim))
    assert out_f32.shape == (batch, output_dim), out_f32.shape
    assert jnp.allclose(out_f32, ref, atol=1e-4, rtol=1e-4), "f32 mismatch"

    # bf16 weights (default): full-rate MXU on v5e/v6e/v7x; loose check vs ref.
    # Accuracy contract: the residual activation is re-cast to bf16 before
    # every block, so error compounds modestly across the 3 blocks.
    prepped_bf16 = prepare_params(params, latent_dim=latent_dim,
                                  output_dim=output_dim)
    out_bf16 = jax.block_until_ready(
        generator_forward(noise, prepped_bf16, output_dim=output_dim))
    assert out_bf16.shape == (batch, output_dim), out_bf16.shape
    assert bool(jnp.all(jnp.isfinite(out_bf16))), "bf16 output not finite"
    assert jnp.allclose(out_bf16, ref, atol=1e-1, rtol=1e-1), "bf16 mismatch"

    # Multi-tile grid path (>= 2 grid steps + row padding): strict f32 check.
    big_b = 1032
    noise_big = jax.random.normal(k_big, (big_b, latent_dim), jnp.float32)
    out_big = jax.block_until_ready(
        generator_forward(noise_big, prepped_f32, output_dim=output_dim))
    ref_big = _reference_forward(noise_big, params)
    assert out_big.shape == (big_b, output_dim), out_big.shape
    assert jnp.allclose(out_big, ref_big, atol=1e-4, rtol=1e-4), "multi-tile mismatch"

    print("KERNEL_OK")
</pallas_src>

<mosaic_0001>
module attributes {stable_mosaic.version = 11 : i64} {
  func.func @_generator_kernel(%arg0: i32, %arg1: memref<8x32xf32, #tpu.memory_space<vmem>>, %arg2: memref<32x128xf32, #tpu.memory_space<vmem>>, %arg3: memref<1x128xf32, #tpu.memory_space<vmem>>, %arg4: memref<1x128xf32, #tpu.memory_space<vmem>>, %arg5: memref<128x128xf32, #tpu.memory_space<vmem>>, %arg6: memref<1x128xf32, #tpu.memory_space<vmem>>, %arg7: memref<1x128xf32, #tpu.memory_space<vmem>>, %arg8: memref<128x128xf32, #tpu.memory_space<vmem>>, %arg9: memref<1x128xf32, #tpu.memory_space<vmem>>, %arg10: memref<1x128xf32, #tpu.memory_space<vmem>>, %arg11: memref<8x128xf32, #tpu.memory_space<vmem>>, %arg12: memref<8x128xf32, #tpu.memory_space<vmem>>) attributes {dimension_semantics = [#tpu.dimension_semantics<parallel>], iteration_bounds = array<i64: 1>, scalar_prefetch = 0 : i64, scratch_operands = 1 : i64, tpu.core_type = #tpu.core_type<tc>, window_params = [{transform_indices = @transform_0, window_bounds = array<i64: 8, 32>}, {pipeline_mode = #tpu.pipeline_mode<synchronous>, transform_indices = @transform_1, window_bounds = array<i64: 32, 128>}, {pipeline_mode = #tpu.pipeline_mode<synchronous>, transform_indices = @transform_2, window_bounds = array<i64: 1, 128>}, {pipeline_mode = #tpu.pipeline_mode<synchronous>, transform_indices = @transform_3, window_bounds = array<i64: 1, 128>}, {pipeline_mode = #tpu.pipeline_mode<synchronous>, transform_indices = @transform_4, window_bounds = array<i64: 128, 128>}, {pipeline_mode = #tpu.pipeline_mode<synchronous>, transform_indices = @transform_5, window_bounds = array<i64: 1, 128>}, {pipeline_mode = #tpu.pipeline_mode<synchronous>, transform_indices = @transform_6, window_bounds = array<i64: 1, 128>}, {pipeline_mode = #tpu.pipeline_mode<synchronous>, transform_indices = @transform_7, window_bounds = array<i64: 128, 128>}, {pipeline_mode = #tpu.pipeline_mode<synchronous>, transform_indices = @transform_8, window_bounds = array<i64: 1, 128>}, {pipeline_mode = #tpu.pipeline_mode<synchronous>, transform_indices = @transform_9, window_bounds = array<i64: 1, 128>}, {transform_indices = @transform_10, window_bounds = array<i64: 8, 128>}]} {
    %c0 = arith.constant 0 : index
    %c0_0 = arith.constant 0 : index
    %0 = vector.load %arg1[%c0, %c0_0] : memref<8x32xf32, #tpu.memory_space<vmem>>, vector<8x32xf32>
    %cst = arith.constant 0.000000e+00 : f32
    %1 = vector.broadcast %cst : f32 to vector<8x128xf32>
    %c0_1 = arith.constant 0 : index
    %c0_2 = arith.constant 0 : index
    %2 = vector.load %arg12[%c0_1, %c0_2] : memref<8x128xf32, #tpu.memory_space<vmem>>, vector<8x128xf32>
    tpu.vector_store %arg12[%c0_1, %c0_2], %1 {strides = array<i32>} : memref<8x128xf32, #tpu.memory_space<vmem>>, vector<8x128xf32>,
    %c0_3 = arith.constant 0 : index
    %c0_4 = arith.constant 0 : index
    %3 = vector.load %arg12[%c0_3, %c0_4] : memref<8x128xf32, #tpu.memory_space<vmem>>, vector<8x32xf32>
    tpu.vector_store %arg12[%c0_3, %c0_4], %0 {strides = array<i32>} : memref<8x128xf32, #tpu.memory_space<vmem>>, vector<8x32xf32>,
    %c0_5 = arith.constant 0 : index
    %c0_6 = arith.constant 0 : index
    %4 = vector.load %arg12[%c0_5, %c0_6] : memref<8x128xf32, #tpu.memory_space<vmem>>, vector<8x128xf32>
    %c0_7 = arith.constant 0 : index
    %c0_8 = arith.constant 0 : index
    %5 = vector.load %arg2[%c0_7, %c0_8] : memref<32x128xf32, #tpu.memory_space<vmem>>, vector<32x128xf32>
    %cst_9 = arith.constant dense<0.000000e+00> : vector<8x128xf32>
    %6 = tpu.matmul %0, %5, %cst_9 {dimension_numbers = #tpu.dot_dimension_numbers<[1], [0], [0], [1], [0, 0, 1, 1], [], []>} : vector<8x32xf32>, vector<32x128xf32>, vector<8x128xf32> -> vector<8x128xf32>
    %cst_10 = arith.constant dense<0.000000e+00> : vector<8xf32>
    %7 = vector.multi_reduction <add>, %6, %cst_10 [1] : vector<8x128xf32> to vector<8xf32>
    %8 = vector.shape_cast %7 : vector<8xf32> to vector<8x1xf32>
    %cst_11 = arith.constant 3.125000e-02 : f32
    %9 = vector.broadcast %cst_11 : f32 to vector<8x1xf32>
    %10 = arith.mulf %8, %9 : vector<8x1xf32>
    %11 = arith.mulf %6, %6 : vector<8x128xf32>
    %cst_12 = arith.constant dense<0.000000e+00> : vector<8xf32>
    %12 = vector.multi_reduction <add>, %11, %cst_12 [1] : vector<8x128xf32> to vector<8xf32>
    %13 = vector.shape_cast %12 : vector<8xf32> to vector<8x1xf32>
    %cst_13 = arith.constant 3.125000e-02 : f32
    %14 = vector.broadcast %cst_13 : f32 to vector<8x1xf32>
    %15 = arith.mulf %13, %14 : vector<8x1xf32>
    %16 = arith.mulf %10, %10 : vector<8x1xf32>
    %17 = arith.subf %15, %16 : vector<8x1xf32>
    %cst_14 = arith.constant 0.000000e+00 : f32
    %18 = vector.broadcast %cst_14 : f32 to vector<8x1xf32>
    %19 = arith.maximumf %17, %18 : vector<8x1xf32>
    %20 = vector.broadcast %10 : vector<8x1xf32> to vector<8x128xf32>
    %21 = arith.subf %6, %20 : vector<8x128xf32>
    %cst_15 = arith.constant 9.99999974E-6 : f32
    %22 = vector.broadcast %cst_15 : f32 to vector<8x1xf32>
    %23 = arith.addf %19, %22 : vector<8x1xf32>
    %24 = math.rsqrt %23 : vector<8x1xf32>
    %25 = vector.broadcast %24 : vector<8x1xf32> to vector<8x128xf32>
    %26 = arith.mulf %21, %25 : vector<8x128xf32>
    %c0_16 = arith.constant 0 : index
    %c0_17 = arith.constant 0 : index
    %27 = vector.load %arg3[%c0_16, %c0_17] : memref<1x128xf32, #tpu.memory_space<vmem>>, vector<1x128xf32>
    %28 = vector.broadcast %27 : vector<1x128xf32> to vector<8x128xf32>
    %29 = arith.mulf %26, %28 : vector<8x128xf32>
    %c0_18 = arith.constant 0 : index
    %c0_19 = arith.constant 0 : index
    %30 = vector.load %arg4[%c0_18, %c0_19] : memref<1x128xf32, #tpu.memory_space<vmem>>, vector<1x128xf32>
    %31 = vector.broadcast %30 : vector<1x128xf32> to vector<8x128xf32>
    %32 = arith.addf %29, %31 : vector<8x128xf32>
    %33 = math.tanh %32 : vector<8x128xf32>
    %34 = arith.addf %33, %4 : vector<8x128xf32>
    %c0_20 = arith.constant 0 : index
    %c0_21 = arith.constant 0 : index
    %35 = vector.load %arg5[%c0_20, %c0_21] : memref<128x128xf32, #tpu.memory_space<vmem>>, vector<128x128xf32>
    %cst_22 = arith.constant dense<0.000000e+00> : vector<8x128xf32>
    %36 = tpu.matmul %34, %35, %cst_22 {dimension_numbers = #tpu.dot_dimension_numbers<[1], [0], [0], [1], [0, 0, 1, 1], [], []>} : vector<8x128xf32>, vector<128x128xf32>, vector<8x128xf32> -> vector<8x128xf32>
    %cst_23 = arith.constant dense<0.000000e+00> : vector<8xf32>
    %37 = vector.multi_reduction <add>, %36, %cst_23 [1] : vector<8x128xf32> to vector<8xf32>
    %38 = vector.shape_cast %37 : vector<8xf32> to vector<8x1xf32>
    %cst_24 = arith.constant 3.125000e-02 : f32
    %39 = vector.broadcast %cst_24 : f32 to vector<8x1xf32>
    %40 = arith.mulf %38, %39 : vector<8x1xf32>
    %41 = arith.mulf %36, %36 : vector<8x128xf32>
    %cst_25 = arith.constant dense<0.000000e+00> : vector<8xf32>
    %42 = vector.multi_reduction <add>, %41, %cst_25 [1] : vector<8x128xf32> to vector<8xf32>
    %43 = vector.shape_cast %42 : vector<8xf32> to vector<8x1xf32>
    %cst_26 = arith.constant 3.125000e-02 : f32
    %44 = vector.broadcast %cst_26 : f32 to vector<8x1xf32>
    %45 = arith.mulf %43, %44 : vector<8x1xf32>
    %46 = arith.mulf %40, %40 : vector<8x1xf32>
    %47 = arith.subf %45, %46 : vector<8x1xf32>
    %cst_27 = arith.constant 0.000000e+00 : f32
    %48 = vector.broadcast %cst_27 : f32 to vector<8x1xf32>
    %49 = arith.maximumf %47, %48 : vector<8x1xf32>
    %50 = vector.broadcast %40 : vector<8x1xf32> to vector<8x128xf32>
    %51 = arith.subf %36, %50 : vector<8x128xf32>
    %cst_28 = arith.constant 9.99999974E-6 : f32
    %52 = vector.broadcast %cst_28 : f32 to vector<8x1xf32>
    %53 = arith.addf %49, %52 : vector<8x1xf32>
    %54 = math.rsqrt %53 : vector<8x1xf32>
    %55 = vector.broadcast %54 : vector<8x1xf32> to vector<8x128xf32>
    %56 = arith.mulf %51, %55 : vector<8x128xf32>
    %c0_29 = arith.constant 0 : index
    %c0_30 = arith.constant 0 : index
    %57 = vector.load %arg6[%c0_29, %c0_30] : memref<1x128xf32, #tpu.memory_space<vmem>>, vector<1x128xf32>
    %58 = vector.broadcast %57 : vector<1x128xf32> to vector<8x128xf32>
    %59 = arith.mulf %56, %58 : vector<8x128xf32>
    %c0_31 = arith.constant 0 : index
    %c0_32 = arith.constant 0 : index
    %60 = vector.load %arg7[%c0_31, %c0_32] : memref<1x128xf32, #tpu.memory_space<vmem>>, vector<1x128xf32>
    %61 = vector.broadcast %60 : vector<1x128xf32> to vector<8x128xf32>
    %62 = arith.addf %59, %61 : vector<8x128xf32>
    %63 = math.tanh %62 : vector<8x128xf32>
    %64 = arith.addf %63, %34 : vector<8x128xf32>
    %c0_33 = arith.constant 0 : index
    %c0_34 = arith.constant 0 : index
    %65 = vector.load %arg8[%c0_33, %c0_34] : memref<128x128xf32, #tpu.memory_space<vmem>>, vector<128x128xf32>
    %cst_35 = arith.constant dense<0.000000e+00> : vector<8x128xf32>
    %66 = tpu.matmul %64, %65, %cst_35 {dimension_numbers = #tpu.dot_dimension_numbers<[1], [0], [0], [1], [0, 0, 1, 1], [], []>} : vector<8x128xf32>, vector<128x128xf32>, vector<8x128xf32> -> vector<8x128xf32>
    %cst_36 = arith.constant dense<0.000000e+00> : vector<8xf32>
    %67 = vector.multi_reduction <add>, %66, %cst_36 [1] : vector<8x128xf32> to vector<8xf32>
    %68 = vector.shape_cast %67 : vector<8xf32> to vector<8x1xf32>
    %cst_37 = arith.constant 6.250000e-02 : f32
    %69 = vector.broadcast %cst_37 : f32 to vector<8x1xf32>
    %70 = arith.mulf %68, %69 : vector<8x1xf32>
    %71 = arith.mulf %66, %66 : vector<8x128xf32>
    %cst_38 = arith.constant dense<0.000000e+00> : vector<8xf32>
    %72 = vector.multi_reduction <add>, %71, %cst_38 [1] : vector<8x128xf32> to vector<8xf32>
    %73 = vector.shape_cast %72 : vector<8xf32> to vector<8x1xf32>
    %cst_39 = arith.constant 6.250000e-02 : f32
    %74 = vector.broadcast %cst_39 : f32 to vector<8x1xf32>
    %75 = arith.mulf %73, %74 : vector<8x1xf32>
    %76 = arith.mulf %70, %70 : vector<8x1xf32>
    %77 = arith.subf %75, %76 : vector<8x1xf32>
    %cst_40 = arith.constant 0.000000e+00 : f32
    %78 = vector.broadcast %cst_40 : f32 to vector<8x1xf32>
    %79 = arith.maximumf %77, %78 : vector<8x1xf32>
    %80 = vector.broadcast %70 : vector<8x1xf32> to vector<8x128xf32>
    %81 = arith.subf %66, %80 : vector<8x128xf32>
    %cst_41 = arith.constant 9.99999974E-6 : f32
    %82 = vector.broadcast %cst_41 : f32 to vector<8x1xf32>
    %83 = arith.addf %79, %82 : vector<8x1xf32>
    %84 = math.rsqrt %83 : vector<8x1xf32>
    %85 = vector.broadcast %84 : vector<8x1xf32> to vector<8x128xf32>
    %86 = arith.mulf %81, %85 : vector<8x128xf32>
    %c0_42 = arith.constant 0 : index
    %c0_43 = arith.constant 0 : index
    %87 = vector.load %arg9[%c0_42, %c0_43] : memref<1x128xf32, #tpu.memory_space<vmem>>, vector<1x128xf32>
    %88 = vector.broadcast %87 : vector<1x128xf32> to vector<8x128xf32>
    %89 = arith.mulf %86, %88 : vector<8x128xf32>
    %c0_44 = arith.constant 0 : index
    %c0_45 = arith.constant 0 : index
    %90 = vector.load %arg10[%c0_44, %c0_45] : memref<1x128xf32, #tpu.memory_space<vmem>>, vector<1x128xf32>
    %91 = vector.broadcast %90 : vector<1x128xf32> to vector<8x128xf32>
    %92 = arith.addf %89, %91 : vector<8x128xf32>
    %93 = math.tanh %92 : vector<8x128xf32>
    %c0_46 = arith.constant 0 : index
    %c0_47 = arith.constant 0 : index
    %94 = vector.load %arg11[%c0_46, %c0_47] : memref<8x128xf32, #tpu.memory_space<vmem>>, vector<8x128xf32>
    tpu.vector_store %arg11[%c0_46, %c0_47], %93 {strides = array<i32>} : memref<8x128xf32, #tpu.memory_space<vmem>>, vector<8x128xf32>,
    return
  }
  func.func @transform_0(%arg0: i32) -> (i32, i32) {
    %c0_i32 = arith.constant 0 : i32
    %c0_i32_0 = arith.constant 0 : i32
    return %arg0, %c0_i32 : i32, i32
  }
  func.func @transform_1(%arg0: i32) -> (i32, i32) {
    %c0_i32 = arith.constant 0 : i32
    %c0_i32_0 = arith.constant 0 : i32
    %c0_i32_1 = arith.constant 0 : i32
    return %c0_i32, %c0_i32_0 : i32, i32
  }
  func.func @transform_2(%arg0: i32) -> (i32, i32) {
    %c0_i32 = arith.constant 0 : i32
    %c0_i32_0 = arith.constant 0 : i32
    %c0_i32_1 = arith.constant 0 : i32
    return %c0_i32, %c0_i32_0 : i32, i32
  }
  func.func @transform_3(%arg0: i32) -> (i32, i32) {
    %c0_i32 = arith.constant 0 : i32
    %c0_i32_0 = arith.constant 0 : i32
    %c0_i32_1 = arith.constant 0 : i32
    return %c0_i32, %c0_i32_0 : i32, i32
  }
  func.func @transform_4(%arg0: i32) -> (i32, i32) {
    %c0_i32 = arith.constant 0 : i32
    %c0_i32_0 = arith.constant 0 : i32
    %c0_i32_1 = arith.constant 0 : i32
    return %c0_i32, %c0_i32_0 : i32, i32
  }
  func.func @transform_5(%arg0: i32) -> (i32, i32) {
    %c0_i32 = arith.constant 0 : i32
    %c0_i32_0 = arith.constant 0 : i32
    %c0_i32_1 = arith.constant 0 : i32
    return %c0_i32, %c0_i32_0 : i32, i32
  }
  func.func @transform_6(%arg0: i32) -> (i32, i32) {
    %c0_i32 = arith.constant 0 : i32
    %c0_i32_0 = arith.constant 0 : i32
    %c0_i32_1 = arith.constant 0 : i32
    return %c0_i32, %c0_i32_0 : i32, i32
  }
  func.func @transform_7(%arg0: i32) -> (i32, i32) {
    %c0_i32 = arith.constant 0 : i32
    %c0_i32_0 = arith.constant 0 : i32
    %c0_i32_1 = arith.constant 0 : i32
    return %c0_i32, %c0_i32_0 : i32, i32
  }
  func.func @transform_8(%arg0: i32) -> (i32, i32) {
    %c0_i32 = arith.constant 0 : i32
    %c0_i32_0 = arith.constant 0 : i32
    %c0_i32_1 = arith.constant 0 : i32
    return %c0_i32, %c0_i32_0 : i32, i32
  }
  func.func @transform_9(%arg0: i32) -> (i32, i32) {
    %c0_i32 = arith.constant 0 : i32
    %c0_i32_0 = arith.constant 0 : i32
    %c0_i32_1 = arith.constant 0 : i32
    return %c0_i32, %c0_i32_0 : i32, i32
  }
  func.func @transform_10(%arg0: i32) -> (i32, i32) {
    %c0_i32 = arith.constant 0 : i32
    %c0_i32_0 = arith.constant 0 : i32
    return %arg0, %c0_i32 : i32, i32
  }
}

</mosaic_0001>

<llo_original>
// kernel: generator_forward.1
$region0: #{generator_forward.1}
  #allocation0 [shape = 'u32[]', space=smem, size = 0x4, offset = 0x4, fixed_abs, tag = 'smem constant byte address 0x4 - core index']
  #allocation1 [shape = 'u32[72,128]{1,0:T(1,128)}', space=vmem, size = 0x9000, scoped, tag = 'internal scratch']
  #allocation2 [shape = 'f32[8,128]{1,0:T(8,128)}', space=vmem, size = 0x1000, scoped, tag = 'scratch operand']
  %s0 = inlined_call_operand.hbm [shape: f32[8,32], index: 0, kind: input, shape index: {}]
  %s1 = inlined_call_operand.hbm [shape: f32[32,128], index: 1, kind: input, shape index: {}]
  %s2 = inlined_call_operand.vmem [shape: f32[1,128], index: 2, kind: input, shape index: {}]
  %s3 = inlined_call_operand.hbm [shape: f32[1,128], index: 3, kind: input, shape index: {}]
  %s4 = inlined_call_operand.hbm [shape: f32[128,128], index: 4, kind: input, shape index: {}]
  %s5 = inlined_call_operand.vmem [shape: f32[1,128], index: 5, kind: input, shape index: {}]
  %s6 = inlined_call_operand.hbm [shape: f32[1,128], index: 6, kind: input, shape index: {}]
  %s7 = inlined_call_operand.hbm [shape: f32[128,128], index: 7, kind: input, shape index: {}]
  %s8 = inlined_call_operand.vmem [shape: f32[1,128], index: 8, kind: input, shape index: {}]
  %s9 = inlined_call_operand.hbm [shape: f32[1,128], index: 9, kind: input, shape index: {}]
  %s10 = inlined_call_operand.hbm [shape: f32[8,128], index: 10, kind: output, shape index: {}]
  %s11 = sld [smem:[#allocation0]]
  $region78: #{generator_forward.1} parent=0
    _
  %s13 = ssub.s32 1, %s11
  %s14 = scalar_select 0, %s13, %s11
  $region1: #{generator_forward.1} parent=0
    #allocation3 [shape = 'u8[4096]{0}', space=vmem, size = 0x1000, scoped, tag = 'input window, operand 0, single buffered']
    #allocation4 [shape = 's32[1]{0}', space=sflag, size = 0x4, scoped, tag = 'scoped memory for generator_forward.1']
    #allocation5 [shape = 's32[1]{0}', space=sflag, size = 0x4, scoped, tag = 'scoped memory for generator_forward.1']
    #allocation6 [shape = 'u8[16384]{0}', space=vmem, size = 0x4000, scoped, tag = 'input window, operand 1, single buffered']
    #allocation7 [shape = 's32[1]{0}', space=sflag, size = 0x4, scoped, tag = 'scoped memory for generator_forward.1']
    #allocation8 [shape = 'u8[512]{0}', space=vmem, size = 0x400, scoped, tag = 'input window, operand 3, single buffered']
    #allocation9 [shape = 'u8[65536]{0}', space=vmem, size = 0x10000, scoped, tag = 'input window, operand 4, single buffered']
    #allocation10 [shape = 's32[1]{0}', space=sflag, size = 0x4, scoped, tag = 'scoped memory for generator_forward.1']
    #allocation11 [shape = 'u8[512]{0}', space=vmem, size = 0x400, scoped, tag = 'input window, operand 6, single buffered']
    #allocation12 [shape = 'u8[65536]{0}', space=vmem, size = 0x10000, scoped, tag = 'input window, operand 7, single buffered']
    #allocation13 [shape = 's32[1]{0}', space=sflag, size = 0x4, scoped, tag = 'scoped memory for generator_forward.1']
    #allocation14 [shape = 'u8[512]{0}', space=vmem, size = 0x400, scoped, tag = 'input window, operand 9, single buffered']
    #allocation15 [shape = 'u8[4096]{0}', space=vmem, size = 0x1000, scoped, tag = 'output window, operand 0, single buffered']
    %15 = vsyncpa [#allocation4], 0
    %16 = vsyncpa [#allocation7], 0
    %17 = vsyncpa [#allocation10], 0
    %18 = vsyncpa [#allocation13], 0
    %19 = vsyncpa [#allocation5], 0
    // Predicated region
    $region2: #{generator_forward.1} parent=1 // pred_check
      _
    $region3: #{generator_forward.1} parent=1 // pred_check_branch
      %21 = sbr.rel (0) target = $region5
    $region4: #{generator_forward.1} parent=1 // pred_region
      %23 = vsyncadd [#allocation4], 0
      %s25 = sshll.u32 %s0, 4
      %s26 = int_to_ptr.hbm [resolvable:$true] %s25
      %s27 = sshll.u32 [#allocation3], 4
      %s28 = int_to_ptr.vmem [resolvable:$true] %s27
      %30 = dma.hbm_to_vmem [thread:$0]  %s26, 128, %s28, [#allocation4]
    $region5: #{generator_forward.1} parent=1 // pred_fallthru
      _
    // Predicated region
    $region6: #{generator_forward.1} parent=1 // pred_check
      _
    $region7: #{generator_forward.1} parent=1 // pred_check_branch
      %32 = sbr.rel (0) target = $region9
    $region8: #{generator_forward.1} parent=1 // pred_region
      %34 = vsyncadd [#allocation7], 0
      %s35 = sshll.u32 %s1, 4
      %s36 = int_to_ptr.hbm [resolvable:$true] %s35
      %s37 = sshll.u32 [#allocation6], 4
      %s38 = int_to_ptr.vmem [resolvable:$true] %s37
      %43 = dma.hbm_to_vmem [thread:$0]  %s36, 512, %s38, [#allocation7], 128, 128, 8
    $region9: #{generator_forward.1} parent=1 // pred_fallthru
      _
    // Predicated region
    $region10: #{generator_forward.1} parent=1 // pred_check
      _
    $region11: #{generator_forward.1} parent=1 // pred_check_branch
      %45 = sbr.rel (0) target = $region13
    $region12: #{generator_forward.1} parent=1 // pred_region
      _
    $region13: #{generator_forward.1} parent=1 // pred_fallthru
      _
    // Predicated region
    $region14: #{generator_forward.1} parent=1 // pred_check
      _
    $region15: #{generator_forward.1} parent=1 // pred_check_branch
      %47 = sbr.rel (0) target = $region17
    $region16: #{generator_forward.1} parent=1 // pred_region
      %49 = vsyncadd [#allocation7], 0
      %s51 = sshll.u32 %s3, 4
      %s52 = int_to_ptr.hbm [resolvable:$true] %s51
      %s53 = sshll.u32 [#allocation8], 4
      %s54 = int_to_ptr.vmem [resolvable:$true] %s53
      %56 = dma.hbm_to_vmem [thread:$0]  %s52, 16, %s54, [#allocation7]
    $region17: #{generator_forward.1} parent=1 // pred_fallthru
      _
    // Predicated region
    $region18: #{generator_forward.1} parent=1 // pred_check
      _
    $region19: #{generator_forward.1} parent=1 // pred_check_branch
      %58 = sbr.rel (0) target = $region21
    $region20: #{generator_forward.1} parent=1 // pred_region
      %60 = vsyncadd [#allocation10], 0
      %s61 = sshll.u32 %s4, 4
      %s62 = int_to_ptr.hbm [resolvable:$true] %s61
      %s63 = sshll.u32 [#allocation9], 4
      %s64 = int_to_ptr.vmem [resolvable:$true] %s63
      %69 = dma.hbm_to_vmem [thread:$0]  %s62, 2048, %s64, [#allocation10], 128, 128, 8
    $region21: #{generator_forward.1} parent=1 // pred_fallthru
      _
    // Predicated region
    $region22: #{generator_forward.1} parent=1 // pred_check
      _
    $region23: #{generator_forward.1} parent=1 // pred_check_branch
      %71 = sbr.rel (0) target = $region25
    $region24: #{generator_forward.1} parent=1 // pred_region
      _
    $region25: #{generator_forward.1} parent=1 // pred_fallthru
      _
    // Predicated region
    $region26: #{generator_forward.1} parent=1 // pred_check
      _
    $region27: #{generator_forward.1} parent=1 // pred_check_branch
      %73 = sbr.rel (0) target = $region29
    $region28: #{generator_forward.1} parent=1 // pred_region
      %75 = vsyncadd [#allocation10], 0
      %s77 = sshll.u32 %s6, 4
      %s78 = int_to_ptr.hbm [resolvable:$true] %s77
      %s79 = sshll.u32 [#allocation11], 4
      %s80 = int_to_ptr.vmem [resolvable:$true] %s79
      %82 = dma.hbm_to_vmem [thread:$0]  %s78, 16, %s80, [#allocation10]
    $region29: #{generator_forward.1} parent=1 // pred_fallthru
      _
    // Predicated region
    $region30: #{generator_forward.1} parent=1 // pred_check
      _
    $region31: #{generator_forward.1} parent=1 // pred_check_branch
      %84 = sbr.rel (0) target = $region33
    $region32: #{generator_forward.1} parent=1 // pred_region
      %86 = vsyncadd [#allocation13], 0
      %s87 = sshll.u32 %s7, 4
      %s88 = int_to_ptr.hbm [resolvable:$true] %s87
      %s89 = sshll.u32 [#allocation12], 4
      %s90 = int_to_ptr.vmem [resolvable:$true] %s89
      %95 = dma.hbm_to_vmem [thread:$0]  %s88, 2048, %s90, [#allocation13], 128, 128, 8
    $region33: #{generator_forward.1} parent=1 // pred_fallthru
      _
    // Predicated region
    $region34: #{generator_forward.1} parent=1 // pred_check
      _
    $region35: #{generator_forward.1} parent=1 // pred_check_branch
      %97 = sbr.rel (0) target = $region37
    $region36: #{generator_forward.1} parent=1 // pred_region
      _
    $region37: #{generator_forward.1} parent=1 // pred_fallthru
      _
    // Predicated region
    $region38: #{generator_forward.1} parent=1 // pred_check
      _
    $region39: #{generator_forward.1} parent=1 // pred_check_branch
      %99 = sbr.rel (0) target = $region41
    $region40: #{generator_forward.1} parent=1 // pred_region
      %101 = vsyncadd [#allocation13], 0
      %s103 = sshll.u32 %s9, 4
      %s104 = int_to_ptr.hbm [resolvable:$true] %s103
      %s105 = sshll.u32 [#allocation14], 4
      %s106 = int_to_ptr.vmem [resolvable:$true] %s105
      %108 = dma.hbm_to_vmem [thread:$0]  %s104, 16, %s106, [#allocation13]
    $region41: #{generator_forward.1} parent=1 // pred_fallthru
      _
    // Predicated region
    $region42: #{generator_forward.1} parent=1 // pred_check
      _
    $region43: #{generator_forward.1} parent=1 // pred_check_branch
      %110 = sbr.rel (0) target = $region45
    $region44: #{generator_forward.1} parent=1 // pred_region
      %112 = dma.done [#allocation4], 128
    $region45: #{generator_forward.1} parent=1 // pred_fallthru
      _
    // Predicated region
    $region46: #{generator_forward.1} parent=1 // pred_check
      _
    $region47: #{generator_forward.1} parent=1 // pred_check_branch
      %114 = sbr.rel (0) target = $region49
    $region48: #{generator_forward.1} parent=1 // pred_region
      %116 = dma.done [#allocation7], 512
    $region49: #{generator_forward.1} parent=1 // pred_fallthru
      _
    // Predicated region
    $region50: #{generator_forward.1} parent=1 // pred_check
      _
    $region51: #{generator_forward.1} parent=1 // pred_check_branch
      %118 = sbr.rel (0) target = $region53
    $region52: #{generator_forward.1} parent=1 // pred_region
      %120 = dma.done [#allocation7], 16
    $region53: #{generator_forward.1} parent=1 // pred_fallthru
      _
    // Predicated region
    $region54: #{generator_forward.1} parent=1 // pred_check
      _
    $region55: #{generator_forward.1} parent=1 // pred_check_branch
      %122 = sbr.rel (0) target = $region57
    $region56: #{generator_forward.1} parent=1 // pred_region
      %124 = dma.done [#allocation10], 2048
    $region57: #{generator_forward.1} parent=1 // pred_fallthru
      _
    // Predicated region
    $region58: #{generator_forward.1} parent=1 // pred_check
      _
    $region59: #{generator_forward.1} parent=1 // pred_check_branch
      %126 = sbr.rel (0) target = $region61
    $region60: #{generator_forward.1} parent=1 // pred_region
      %128 = dma.done [#allocation10], 16
    $region61: #{generator_forward.1} parent=1 // pred_fallthru
      _
    // Predicated region
    $region62: #{generator_forward.1} parent=1 // pred_check
      _
    $region63: #{generator_forward.1} parent=1 // pred_check_branch
      %130 = sbr.rel (0) target = $region65
    $region64: #{generator_forward.1} parent=1 // pred_region
      %132 = dma.done [#allocation13], 2048
    $region65: #{generator_forward.1} parent=1 // pred_fallthru
      _
    // Predicated region
    $region66: #{generator_forward.1} parent=1 // pred_check
      _
    $region67: #{generator_forward.1} parent=1 // pred_check_branch
      %134 = sbr.rel (0) target = $region69
    $region68: #{generator_forward.1} parent=1 // pred_region
      %136 = dma.done [#allocation13], 16
    $region69: #{generator_forward.1} parent=1 // pred_fallthru
      _
    %v137 = vld [vmem:[#allocation3] sm:$0xff]
    %138 = vst [vmem:[#allocation2] sm:$0xff] 0.0
    %vm139 = vcmask 261120
    %140 = vst.msk [vmem:[#allocation2] sm:$0xff] %vm139, %v137
    %v141 = vld [vmem:[#allocation2] sm:$0xff]
    %v142 = vld [vmem:[#allocation6] sm:$0xff]
    %v143 = vld [vmem:[#allocation6 + $0x8] sm:$0xff]
    %v144 = vld [vmem:[#allocation6 + $0x10] sm:$0xff]
    %v145 = vld [vmem:[#allocation6 + $0x18] sm:$0xff]
    %v147 = vsel %vm139, %v137, 0
    %149 = vmatpush.msra.mxu0 0.0
    %150 = vmatpush.msra.mxu0 0.0
    %151 = vmatpush.msra.mxu0 0.0
    %152 = vmatpush.msra.mxu0 0.0
    %153 = vmatpush.msra.mxu0 0.0
    %154 = vmatpush.msra.mxu0 0.0
    %155 = vmatpush.msra.mxu0 0.0
    %156 = vmatpush.msra.mxu0 0.0
    %157 = vmatpush.msra.mxu0 0.0
    %158 = vmatpush.msra.mxu0 0.0
    %159 = vmatpush.msra.mxu0 0.0
    %160 = vmatpush.msra.mxu0 0.0
    %161 = vmatpush.msra.mxu0 %v145
    %162 = vmatpush.msra.mxu0 %v144
    %163 = vmatpush.msra.mxu0 %v143
    %164 = vmatpush.msra.mxu0 %v142
    %165 = vmatmul.f32.gmra.mxu0 %v147
    %v166 = vpop.f32.mrf.mxu0
    %v167 = vadd.f32 0.0, %v166
    %168 = vdwg.mxu0
    %169 = vadd.xlane.f32.xlu0 %v167
    %v170 = vpop.xlane.xlu0 %169
    %v171 = vmul.f32 %v170, 0.03125
    %v172 = vmul.f32 %v167, %v167
    %173 = vadd.xlane.f32.xlu0 %v172
    %v174 = vpop.xlane.xlu0 %173
    %v175 = vmul.f32 %v174, 0.03125
    %v176 = vmul.f32 %v171, %v171
    %v177 = vsub.f32 %v175, %v176
    %v178 = vmax.f32 %v177, 0.0
    %v179 = vsub.f32 %v167, %v171
    %v180 = vadd.f32 %v178, 1e-05
    %v181 = vrsqrt.pop %v180
    %v182 = vmul.f32 %v181, %v180
    %v183 = vmul.f32 %v182, %v181
    %v184 = vmul.f32 0.5, %v183
    %v185 = vsub.f32 1.5, %v184
    %v186 = vmul.f32 %v181, %v185
    %vm187 = vweird.f32 %v180
    %vm188 = vweird.f32 %v181
    %vm189 = vmor %vm187, %vm188
    %v190 = vsel %vm189, %v181, %v186
    %v191 = vmul.f32 %v179, %v190
    %v192 = vld [vmem:[%s2] sm:$0x1]
    %v194 = vperm.slane %v192, 0
    %v196 = vmul.f32 %v191, %v194
    %v197 = vld [vmem:[#allocation8] sm:$0x1]
    %v199 = vperm.slane %v197, 0
    %v201 = vadd.f32 %v196, %v199
    %v202 = vtanh.pop %v201
    %v203 = vadd.f32 %v202, %v141
    %v204 = vld [vmem:[#allocation9] sm:$0xff]
    %v205 = vld [vmem:[#allocation9 + $0x8] sm:$0xff]
    %v206 = vld [vmem:[#allocation9 + $0x10] sm:$0xff]
    %v207 = vld [vmem:[#allocation9 + $0x18] sm:$0xff]
    %v208 = vld [vmem:[#allocation9 + $0x20] sm:$0xff]
    %v209 = vld [vmem:[#allocation9 + $0x28] sm:$0xff]
    %v210 = vld [vmem:[#allocation9 + $0x30] sm:$0xff]
    %v211 = vld [vmem:[#allocation9 + $0x38] sm:$0xff]
    %v212 = vld [vmem:[#allocation9 + $0x40] sm:$0xff]
    %v213 = vld [vmem:[#allocation9 + $0x48] sm:$0xff]
    %v214 = vld [vmem:[#allocation9 + $0x50] sm:$0xff]
    %v215 = vld [vmem:[#allocation9 + $0x58] sm:$0xff]
    %v216 = vld [vmem:[#allocation9 + $0x60] sm:$0xff]
    %v217 = vld [vmem:[#allocation9 + $0x68] sm:$0xff]
    %v218 = vld [vmem:[#allocation9 + $0x70] sm:$0xff]
    %v219 = vld [vmem:[#allocation9 + $0x78] sm:$0xff]
    %220 = vmatpush.msra.mxu0 %v219
    %221 = vmatpush.msra.mxu0 %v218
    %222 = vmatpush.msra.mxu0 %v217
    %223 = vmatpush.msra.mxu0 %v216
    %224 = vmatpush.msra.mxu0 %v215
    %225 = vmatpush.msra.mxu0 %v214
    %226 = vmatpush.msra.mxu0 %v213
    %227 = vmatpush.msra.mxu0 %v212
    %228 = vmatpush.msra.mxu0 %v211
    %229 = vmatpush.msra.mxu0 %v210
    %230 = vmatpush.msra.mxu0 %v209
    %231 = vmatpush.msra.mxu0 %v208
    %232 = vmatpush.msra.mxu0 %v207
    %233 = vmatpush.msra.mxu0 %v206
    %234 = vmatpush.msra.mxu0 %v205
    %235 = vmatpush.msra.mxu0 %v204
    %236 = vmatmul.f32.gmra.mxu0 %v203
    %v237 = vpop.f32.mrf.mxu0
    %v238 = vadd.f32 0.0, %v237
    %239 = vdwg.mxu0
    %240 = vadd.xlane.f32.xlu0 %v238
    %v241 = vpop.xlane.xlu0 %240
    %v242 = vmul.f32 %v241, 0.03125
    %v243 = vmul.f32 %v238, %v238
    %244 = vadd.xlane.f32.xlu0 %v243
    %v245 = vpop.xlane.xlu0 %244
    %v246 = vmul.f32 %v245, 0.03125
    %v247 = vmul.f32 %v242, %v242
    %v248 = vsub.f32 %v246, %v247
    %v249 = vmax.f32 %v248, 0.0
    %v250 = vsub.f32 %v238, %v242
    %v251 = vadd.f32 %v249, 1e-05
    %v252 = vrsqrt.pop %v251
    %v253 = vmul.f32 %v252, %v251
    %v254 = vmul.f32 %v253, %v252
    %v255 = vmul.f32 0.5, %v254
    %v256 = vsub.f32 1.5, %v255
    %v257 = vmul.f32 %v252, %v256
    %vm258 = vweird.f32 %v251
    %vm259 = vweird.f32 %v252
    %vm260 = vmor %vm258, %vm259
    %v261 = vsel %vm260, %v252, %v257
    %v262 = vmul.f32 %v250, %v261
    %v263 = vld [vmem:[%s5] sm:$0x1]
    %v265 = vperm.slane %v263, 0
    %v267 = vmul.f32 %v262, %v265
    %v268 = vld [vmem:[#allocation11] sm:$0x1]
    %v270 = vperm.slane %v268, 0
    %v272 = vadd.f32 %v267, %v270
    %v273 = vtanh.pop %v272
    %v274 = vadd.f32 %v273, %v203
    %v275 = vld [vmem:[#allocation12] sm:$0xff]
    %v276 = vld [vmem:[#allocation12 + $0x8] sm:$0xff]
    %v277 = vld [vmem:[#allocation12 + $0x10] sm:$0xff]
    %v278 = vld [vmem:[#allocation12 + $0x18] sm:$0xff]
    %v279 = vld [vmem:[#allocation12 + $0x20] sm:$0xff]
    %v280 = vld [vmem:[#allocation12 + $0x28] sm:$0xff]
    %v281 = vld [vmem:[#allocation12 + $0x30] sm:$0xff]
    %v282 = vld [vmem:[#allocation12 + $0x38] sm:$0xff]
    %v283 = vld [vmem:[#allocation12 + $0x40] sm:$0xff]
    %v284 = vld [vmem:[#allocation12 + $0x48] sm:$0xff]
    %v285 = vld [vmem:[#allocation12 + $0x50] sm:$0xff]
    %v286 = vld [vmem:[#allocation12 + $0x58] sm:$0xff]
    %v287 = vld [vmem:[#allocation12 + $0x60] sm:$0xff]
    %v288 = vld [vmem:[#allocation12 + $0x68] sm:$0xff]
    %v289 = vld [vmem:[#allocation12 + $0x70] sm:$0xff]
    %v290 = vld [vmem:[#allocation12 + $0x78] sm:$0xff]
    %291 = vmatpush.msra.mxu0 %v290
    %292 = vmatpush.msra.mxu0 %v289
    %293 = vmatpush.msra.mxu0 %v288
    %294 = vmatpush.msra.mxu0 %v287
    %295 = vmatpush.msra.mxu0 %v286
    %296 = vmatpush.msra.mxu0 %v285
    %297 = vmatpush.msra.mxu0 %v284
    %298 = vmatpush.msra.mxu0 %v283
    %299 = vmatpush.msra.mxu0 %v282
    %300 = vmatpush.msra.mxu0 %v281
    %301 = vmatpush.msra.mxu0 %v280
    %302 = vmatpush.msra.mxu0 %v279
    %303 = vmatpush.msra.mxu0 %v278
    %304 = vmatpush.msra.mxu0 %v277
    %305 = vmatpush.msra.mxu0 %v276
    %306 = vmatpush.msra.mxu0 %v275
    %307 = vmatmul.f32.gmra.mxu0 %v274
    %v308 = vpop.f32.mrf.mxu0
    %v309 = vadd.f32 0.0, %v308
    %310 = vdwg.mxu0
    %311 = vadd.xlane.f32.xlu0 %v309
    %v312 = vpop.xlane.xlu0 %311
    %v313 = vmul.f32 %v312, 0.0625
    %v314 = vmul.f32 %v309, %v309
    %315 = vadd.xlane.f32.xlu0 %v314
    %v316 = vpop.xlane.xlu0 %315
    %v317 = vmul.f32 %v316, 0.0625
    %v318 = vmul.f32 %v313, %v313
    %v319 = vsub.f32 %v317, %v318
    %v320 = vmax.f32 %v319, 0.0
    %v321 = vsub.f32 %v309, %v313
    %v322 = vadd.f32 %v320, 1e-05
    %v323 = vrsqrt.pop %v322
    %v324 = vmul.f32 %v323, %v322
    %v325 = vmul.f32 %v324, %v323
    %v326 = vmul.f32 0.5, %v325
    %v327 = vsub.f32 1.5, %v326
    %v328 = vmul.f32 %v323, %v327
    %vm329 = vweird.f32 %v322
    %vm330 = vweird.f32 %v323
    %vm331 = vmor %vm329, %vm330
    %v332 = vsel %vm331, %v323, %v328
    %v333 = vmul.f32 %v321, %v332
    %v334 = vld [vmem:[%s8] sm:$0x1]
    %v336 = vperm.slane %v334, 0
    %v338 = vmul.f32 %v333, %v336
    %v339 = vld [vmem:[#allocation14] sm:$0x1]
    %v341 = vperm.slane %v339, 0
    %v343 = vadd.f32 %v338, %v341
    %v344 = vtanh.pop %v343
    %345 = vst [vmem:[#allocation15] sm:$0xff] %v344
    // Predicated region
    $region70: #{generator_forward.1} parent=1 // pred_check
      _
    $region71: #{generator_forward.1} parent=1 // pred_check_branch
      %347 = sbr.rel (0) target = $region73
    $region72: #{generator_forward.1} parent=1 // pred_region
      %349 = vsyncadd [#allocation5], 0
      %s351 = sshll.u32 [#allocation15], 4
      %s352 = int_to_ptr.vmem [resolvable:$true] %s351
      %s353 = sshll.u32 %s10, 4
      %s354 = int_to_ptr.hbm [resolvable:$true] %s353
      %356 = dma.vmem_to_hbm [thread:$0]  %s352, 128, %s354, [#allocation5]
    $region73: #{generator_forward.1} parent=1 // pred_fallthru
      _
    // Predicated region
    $region74: #{generator_forward.1} parent=1 // pred_check
      _
    $region75: #{generator_forward.1} parent=1 // pred_check_branch
      %358 = sbr.rel (0) target = $region77
    $region76: #{generator_forward.1} parent=1 // pred_region
      %360 = dma.done [#allocation5], 128
    $region77: #{generator_forward.1} parent=1 // pred_fallthru
      _
    %361 = vsyncpa [#allocation4], 1
    %362 = vsyncpa [#allocation7], 1
    %363 = vsyncpa [#allocation10], 1
    %364 = vsyncpa [#allocation13], 1
    %365 = vsyncpa [#allocation5], 1

</llo_original>
